<compile_context>
chip_gen: v7x
topology: tpu7x:2x2x1
jax: 0.10.0
libtpu: 0.0.40
codegen_flags: <defaults>
</compile_context>

<pallas_src>
import jax
import jax.numpy as jnp
from jax.experimental import pallas as pl
from jax.experimental.pallas import tpu as pltpu


def _copy_kernel(x_ref, o_ref):
    # Pure tile copy: whole-block load -> unmasked, lane-dense store.
    o_ref[...] = x_ref[...]


# Lane widths tried in order: large multiples of 128 keep stores unmasked and
# lane-dense (the single biggest measured lever for memory-bound kernels).
_LANE_CANDIDATES = (1024, 512, 256, 128)

# Per-buffer tile cap. With one input + one output, each double-buffered,
# peak VMEM is ~4x this (32 MiB) — safe on every generation once the scoped
# VMEM limit is raised explicitly (v5e default 16 MiB, v6e/v7x 32 MiB).
_TILE_BYTES_CAP = 8 * 1024 * 1024

# Never ask for more scoped VMEM than is comfortably available on v7x
# (64 MiB physical, ~48 MiB practical ceiling).
_VMEM_LIMIT_CEILING = 48 * 1024 * 1024

# Upper bound on the (full-extent) lane dim used by the awkward-size fallback.
_MAX_FALLBACK_LANE = 4096


def _pick_lane(total):
    """Pick the last-dim width of the 2-D slab the copy is tiled over."""
    # Preferred: a large multiple of 128 that divides the element count.
    for cand in _LANE_CANDIDATES:
        if total % cand == 0:
            return cand
    # Awkward element count: largest divisor <= _MAX_FALLBACK_LANE. The lane
    # dim is then full-extent in the block (satisfies the (8,128) rule), and
    # tiling/pipelining continues over the row dim — no whole-array VMEM block.
    d = min(_MAX_FALLBACK_LANE, total)
    while d > 1:
        if total % d == 0:
            return d
        d -= 1
    return 1


def _pick_tile_rows(rows, sublane_mult, row_bytes):
    """Row-tile: sublane-aligned, fits the byte budget, prefers exact divisors."""
    if rows <= sublane_mult:
        return rows  # full-extent dim (always legal)
    tm_cap = max(sublane_mult,
                 (_TILE_BYTES_CAP // max(row_bytes, 1))
                 // sublane_mult * sublane_mult)
    tm_cap = min(tm_cap, (rows // sublane_mult) * sublane_mult)
    # Keep >= 2 grid steps when possible so v7x can shard across both TCs.
    if rows >= 2 * sublane_mult:
        half = (rows // 2) // sublane_mult * sublane_mult
        tm_cap = min(tm_cap, max(sublane_mult, half))
    # Prefer a tm that evenly divides rows (no masked trailing block).
    steps = min(1024, tm_cap // sublane_mult)
    for k in range(steps):
        t = tm_cap - k * sublane_mult
        if rows % t == 0:
            return t
    return tm_cap  # partial trailing block; Pallas masks it correctly.


def _materialized_identity(x):
    """Copy `x` through a tiled, pipelined Pallas kernel (identity contents)."""
    orig_shape = x.shape
    total = x.size
    if total == 0:
        return x

    itemsize = jnp.dtype(x.dtype).itemsize
    # Sub-32-bit dtypes pack along sublanes: keep whole packed sublanes.
    packing = max(1, 4 // itemsize)
    sublane_mult = 8 * packing

    lane = _pick_lane(total)
    rows = total // lane
    x2d = x.reshape(rows, lane)

    row_bytes = lane * itemsize
    tm = _pick_tile_rows(rows, sublane_mult, row_bytes)
    grid = (pl.cdiv(rows, tm),)

    tile_bytes = tm * lane * itemsize
    # Cover the double-buffered peak (2 bufs each for input and output tile),
    # plus headroom, without exceeding the v7x-safe ceiling.
    vmem_limit = min(_VMEM_LIMIT_CEILING,
                     max(32 * 1024 * 1024, 4 * tile_bytes + 4 * 1024 * 1024))

    out2d = pl.pallas_call(
        _copy_kernel,
        out_shape=jax.ShapeDtypeStruct((rows, lane), x.dtype),
        grid_spec=pltpu.PrefetchScalarGridSpec(
            num_scalar_prefetch=0,
            grid=grid,
            in_specs=[pl.BlockSpec((tm, lane), lambda i: (i, 0))],
            out_specs=pl.BlockSpec((tm, lane), lambda i: (i, 0)),
        ),
        # Row tiles are independent -> "parallel" lets v7x shard the copy
        # across both TensorCores (neutral on single-TC v5e/v6e).
        compiler_params=pltpu.CompilerParams(
            dimension_semantics=("parallel",),
            vmem_limit_bytes=vmem_limit,
        ),
        # Advertise this as a pure memory op so XLA can schedule/overlap it.
        cost_estimate=pl.CostEstimate(
            flops=0, transcendentals=0,
            bytes_accessed=2 * total * itemsize),
    )(x2d)
    return out2d.reshape(orig_shape)


def data_id_layer(x, *args, materialize=False, alias_input=False, **kwargs):
    """Pallas equivalent of DataIDLayer.forward.

    Default path returns `x` unchanged (true identity: zero HBM traffic).
    Set materialize=True to force a fresh buffer via the tiled Pallas copy.
    alias_input=True means the caller is happy reusing the input buffer, so it
    also short-circuits to `x` (an aliased self-copy would burn 2x HBM bytes
    for zero semantic effect).
    """
    del args, kwargs  # DataIDLayer ignores all extra arguments.
    if not materialize or alias_input:
        return x
    return _materialized_identity(x)


if __name__ == "__main__":
    key = jax.random.PRNGKey(0)

    # Small NCHW input consistent with a data layer in an image model.
    x = jax.random.normal(key, (2, 4, 16, 16), dtype=jnp.float32)

    # 1) Default (recommended) path: no kernel, no copy.
    y0 = data_id_layer(x)
    assert y0 is x

    # 2) Materialized path: exercises the lane-dense Pallas copy kernel.
    y1 = data_id_layer(x, materialize=True)
    jax.block_until_ready(y1)
    assert y1.shape == x.shape and y1.dtype == x.dtype
    assert bool(jnp.all(y1 == x))

    # 3) Larger f32 input: multi-step, double-buffered, two-TC-shardable grid.
    xl = jax.random.normal(key, (4, 16, 128, 128), dtype=jnp.float32)
    yl = data_id_layer(xl, materialize=True)
    jax.block_until_ready(yl)
    assert bool(jnp.all(yl == xl))

    # 4) bf16 input: exercises the dtype-aware sublane (16) row tiling.
    xb = jax.random.normal(key, (4, 16, 64, 128), dtype=jnp.float32
                           ).astype(jnp.bfloat16)
    yb = data_id_layer(xb, materialize=True)
    jax.block_until_ready(yb)
    assert yb.dtype == jnp.bfloat16 and bool(jnp.all(yb == xb))

    # 5) Awkward element count (not a multiple of 128): fallback keeps a
    #    modest full-extent lane dim and tiles over rows (no whole-array block).
    xo = jax.random.normal(key, (3, 5, 20, 24), dtype=jnp.float32)
    yo = data_id_layer(xo, materialize=True)
    jax.block_until_ready(yo)
    assert bool(jnp.all(yo == xo))

    # 6) alias_input short-circuits (no redundant self-copy).
    ya = data_id_layer(x, materialize=True, alias_input=True)
    assert ya is x

    print("KERNEL_OK")
</pallas_src>

<mosaic_0001>
module attributes {stable_mosaic.version = 11 : i64} {
  func.func @_copy_kernel(%arg0: i32, %arg1: memref<2x1024xf32, #tpu.memory_space<vmem>>, %arg2: memref<2x1024xf32, #tpu.memory_space<vmem>>) attributes {dimension_semantics = [#tpu.dimension_semantics<parallel>], iteration_bounds = array<i64: 1>, scalar_prefetch = 0 : i64, scratch_operands = 0 : i64, tpu.core_type = #tpu.core_type<tc>, window_params = [{transform_indices = @transform_0, window_bounds = array<i64: 2, 1024>}, {transform_indices = @transform_1, window_bounds = array<i64: 2, 1024>}]} {
    %c0 = arith.constant 0 : index
    %c0_0 = arith.constant 0 : index
    %0 = vector.load %arg1[%c0, %c0_0] : memref<2x1024xf32, #tpu.memory_space<vmem>>, vector<2x1024xf32>
    %c0_1 = arith.constant 0 : index
    %c0_2 = arith.constant 0 : index
    %1 = vector.load %arg2[%c0_1, %c0_2] : memref<2x1024xf32, #tpu.memory_space<vmem>>, vector<2x1024xf32>
    tpu.vector_store %arg2[%c0_1, %c0_2], %0 {strides = array<i32>} : memref<2x1024xf32, #tpu.memory_space<vmem>>, vector<2x1024xf32>,
    return
  }
  func.func @transform_0(%arg0: i32) -> (i32, i32) {
    %c0_i32 = arith.constant 0 : i32
    %c0_i32_0 = arith.constant 0 : i32
    return %arg0, %c0_i32 : i32, i32
  }
  func.func @transform_1(%arg0: i32) -> (i32, i32) {
    %c0_i32 = arith.constant 0 : i32
    %c0_i32_0 = arith.constant 0 : i32
    return %arg0, %c0_i32 : i32, i32
  }
}

</mosaic_0001>

<llo_original>
// kernel: tpu_custom_call.1
$region0: #{tpu_custom_call.1}
  #allocation0 [shape = 'u32[]', space=smem, size = 0x4, offset = 0x4, fixed_abs, tag = 'smem constant byte address 0x4 - core index']
  #allocation1 [shape = 'u32[144,128]{1,0:T(1,128)}', space=vmem, size = 0x12000, scoped, tag = 'internal scratch']
  %s0 = inlined_call_operand.hbm [shape: f32[2,1024], index: 0, kind: input, shape index: {}]
  %s1 = inlined_call_operand.hbm [shape: f32[2,1024], index: 1, kind: output, shape index: {}]
  %s2 = sld [smem:[#allocation0]]
  $region18: #{tpu_custom_call.1} parent=0
    _
  %s4 = ssub.s32 1, %s2
  %s5 = scalar_select 0, %s4, %s2
  $region1: #{tpu_custom_call.1} parent=0
    #allocation2 [shape = 'u8[8192]{0}', space=vmem, size = 0x2000, scoped, tag = 'input window, operand 0, single buffered']
    #allocation3 [shape = 's32[1]{0}', space=sflag, size = 0x4, scoped, tag = 'scoped memory for tpu_custom_call.1']
    #allocation4 [shape = 's32[1]{0}', space=sflag, size = 0x4, scoped, tag = 'scoped memory for tpu_custom_call.1']
    #allocation5 [shape = 'u8[8192]{0}', space=vmem, size = 0x2000, scoped, tag = 'output window, operand 0, single buffered']
    %6 = vsyncpa [#allocation3], 0
    %7 = vsyncpa [#allocation4], 0
    // Predicated region
    $region2: #{tpu_custom_call.1} parent=1 // pred_check
      _
    $region3: #{tpu_custom_call.1} parent=1 // pred_check_branch
      %9 = sbr.rel (0) target = $region5
    $region4: #{tpu_custom_call.1} parent=1 // pred_region
      %s11 = ssub.s32 256, 256
      %12 = vsyncadd [#allocation3], %s11
      %s14 = sshll.u32 [#allocation2], 4
      %s15 = int_to_ptr.vmem [resolvable:$true] %s14
      %17 = dma.hbm_to_vmem [thread:$0]  %s0, 256, %s15, [#allocation3]
    $region5: #{tpu_custom_call.1} parent=1 // pred_fallthru
      _
    // Predicated region
    $region6: #{tpu_custom_call.1} parent=1 // pred_check
      _
    $region7: #{tpu_custom_call.1} parent=1 // pred_check_branch
      %19 = sbr.rel (0) target = $region9
    $region8: #{tpu_custom_call.1} parent=1 // pred_region
      %20 = dma.done [#allocation3], 256
    $region9: #{tpu_custom_call.1} parent=1 // pred_fallthru
      _
    %v21 = vld [vmem:[#allocation2] sm:$0xff]
    %v22 = vld [vmem:[#allocation2 + $0x8] sm:$0xff]
    %23 = vst [vmem:[#allocation5] sm:$0xff] %v21
    %24 = vst [vmem:[#allocation5 + $0x8] sm:$0xff] %v22
    // Predicated region
    $region10: #{tpu_custom_call.1} parent=1 // pred_check
      _
    $region11: #{tpu_custom_call.1} parent=1 // pred_check_branch
      %26 = sbr.rel (0) target = $region13
    $region12: #{tpu_custom_call.1} parent=1 // pred_region
      %s28 = ssub.s32 256, 256
      %29 = vsyncadd [#allocation4], %s28
      %s31 = sshll.u32 [#allocation5], 4
      %s32 = int_to_ptr.vmem [resolvable:$true] %s31
      %34 = dma.vmem_to_hbm [thread:$0]  %s32, 256, %s1, [#allocation4]
    $region13: #{tpu_custom_call.1} parent=1 // pred_fallthru
      _
    // Predicated region
    $region14: #{tpu_custom_call.1} parent=1 // pred_check
      _
    $region15: #{tpu_custom_call.1} parent=1 // pred_check_branch
      %36 = sbr.rel (0) target = $region17
    $region16: #{tpu_custom_call.1} parent=1 // pred_region
      %37 = dma.done [#allocation4], 256
    $region17: #{tpu_custom_call.1} parent=1 // pred_fallthru
      _
    %38 = vsyncpa [#allocation3], 1
    %39 = vsyncpa [#allocation4], 1

</llo_original>
